<compile_context>
chip_gen: v6e
topology: v6e:2x2x1
jax: 0.10.0
libtpu: 0.0.40
codegen_flags: <defaults>
</compile_context>

<pallas_src>
import functools

import jax
import jax.numpy as jnp
from jax import lax
from jax.experimental import pallas as pl
from jax.experimental.pallas import tpu as pltpu


def _instance_norm_kernel(x_ref, gamma_ref, beta_ref, o_ref, *, eps, inv_t):
    # x_ref: (rb, T) rows of flattened (N*C) instances, time in lanes.
    # gamma_ref / beta_ref: (rb, 1) per-row affine params (already broadcast).
    x = x_ref[...]                                                   # (rb, T)
    mean = jnp.sum(x, axis=-1, keepdims=True) * inv_t                # (rb, 1)
    centered = x - mean
    var = jnp.sum(centered * centered, axis=-1, keepdims=True) * inv_t  # biased
    scale = gamma_ref[...] * lax.rsqrt(var + eps)                    # fold gamma
    o_ref[...] = centered * scale + beta_ref[...]


def _choose_row_block(rows, T, itemsize=4, budget_bytes=8 << 20):
    """Largest row tile (multiple of 8) whose (rb, T) slab fits `budget_bytes`;
    split into >= 2 blocks when possible so both v7x TensorCores get work."""
    rows_padded = pl.cdiv(rows, 8) * 8
    max_rb = max(8, (budget_bytes // (T * itemsize)) // 8 * 8)
    rb = int(min(max_rb, rows_padded))
    if pl.cdiv(rows, rb) < 2 and rows_padded >= 16:
        rb = int(max(8, pl.cdiv(rows_padded // 2, 8) * 8))
    return rb


def instance_norm1d(x, gamma, beta, eps=1e-6):
    """x: (N, C, T) float32.  gamma/beta: (1, C, 1) or (C,).  Returns (N, C, T)."""
    N, C, T = x.shape
    rows = N * C

    # Flatten (N, C) -> rows; broadcast the affine params to one value per row.
    x2 = x.reshape(rows, T)
    gamma_r = jnp.broadcast_to(jnp.asarray(gamma, x.dtype).reshape(1, C, 1),
                               (N, C, 1)).reshape(rows, 1)
    beta_r = jnp.broadcast_to(jnp.asarray(beta, x.dtype).reshape(1, C, 1),
                              (N, C, 1)).reshape(rows, 1)

    rb = _choose_row_block(rows, T, itemsize=x.dtype.itemsize)
    grid = (pl.cdiv(rows, rb),)

    kernel = functools.partial(_instance_norm_kernel,
                               eps=float(eps), inv_t=1.0 / float(T))

    out2 = pl.pallas_call(
        kernel,
        out_shape=jax.ShapeDtypeStruct((rows, T), x.dtype),
        grid_spec=pl.GridSpec(
            grid=grid,
            in_specs=[
                pl.BlockSpec((rb, T), lambda r: (r, 0)),
                pl.BlockSpec((rb, 1), lambda r: (r, 0)),
                pl.BlockSpec((rb, 1), lambda r: (r, 0)),
            ],
            out_specs=pl.BlockSpec((rb, T), lambda r: (r, 0)),
        ),
        compiler_params=pltpu.CompilerParams(
            dimension_semantics=("parallel",),
            # 2x double-buffered (in + out) 8 MiB tiles + tiny affine buffers:
            # above v5e's 16 MiB / v6e's 32 MiB defaults, under v7x's 64 MiB.
            vmem_limit_bytes=48 << 20,
        ),
    )(x2, gamma_r, beta_r)

    return out2.reshape(N, C, T)


def instance_norm1d_ref(x, gamma, beta, eps=1e-6):
    """Plain-JAX reference of the batch-statistics forward path."""
    mean = jnp.mean(x, axis=2, keepdims=True)
    var = jnp.mean(jnp.square(x - mean), axis=2, keepdims=True)
    g = jnp.asarray(gamma).reshape(1, -1, 1)
    b = jnp.asarray(beta).reshape(1, -1, 1)
    return g * (x - mean) * lax.rsqrt(var + eps) + b


if __name__ == "__main__":
    # InstanceNorm1d(num_features=4), input (batch=2, channels=4, time=256)
    N, C, T = 2, 4, 256

    key = jax.random.PRNGKey(0)
    kx, kg, kb = jax.random.split(key, 3)

    x = 2.0 * jax.random.normal(kx, (N, C, T), dtype=jnp.float32) + 0.5
    # affine params, shaped (1, C, 1) like the PyTorch module
    gamma = 1.0 + 0.1 * jax.random.normal(kg, (1, C, 1), dtype=jnp.float32)
    beta = 0.1 * jax.random.normal(kb, (1, C, 1), dtype=jnp.float32)

    out = instance_norm1d(x, gamma, beta, eps=1e-6)
    out = jax.block_until_ready(out)

    ref = instance_norm1d_ref(x, gamma, beta, eps=1e-6)
    assert out.shape == (N, C, T), out.shape
    assert jnp.allclose(out, ref, atol=1e-5, rtol=1e-5), float(jnp.abs(out - ref).max())

    print("KERNEL_OK")
</pallas_src>

<mosaic_0001>
module attributes {stable_mosaic.version = 11 : i64} {
  func.func @_instance_norm_kernel(%arg0: i32, %arg1: memref<8x256xf32, #tpu.memory_space<vmem>>, %arg2: memref<8x1xf32, #tpu.memory_space<vmem>>, %arg3: memref<8x1xf32, #tpu.memory_space<vmem>>, %arg4: memref<8x256xf32, #tpu.memory_space<vmem>>) attributes {dimension_semantics = [#tpu.dimension_semantics<parallel>], iteration_bounds = array<i64: 1>, scalar_prefetch = 0 : i64, scratch_operands = 0 : i64, tpu.core_type = #tpu.core_type<tc>, window_params = [{transform_indices = @transform_0, window_bounds = array<i64: 8, 256>}, {transform_indices = @transform_1, window_bounds = array<i64: 8, 1>}, {transform_indices = @transform_2, window_bounds = array<i64: 8, 1>}, {transform_indices = @transform_3, window_bounds = array<i64: 8, 256>}]} {
    %c0 = arith.constant 0 : index
    %c0_0 = arith.constant 0 : index
    %0 = vector.load %arg1[%c0, %c0_0] : memref<8x256xf32, #tpu.memory_space<vmem>>, vector<8x256xf32>
    %cst = arith.constant dense<0.000000e+00> : vector<8xf32>
    %1 = vector.multi_reduction <add>, %0, %cst [1] : vector<8x256xf32> to vector<8xf32>
    %2 = vector.shape_cast %1 : vector<8xf32> to vector<8x1xf32>
    %cst_1 = arith.constant 3.906250e-03 : f32
    %3 = vector.broadcast %cst_1 : f32 to vector<8x1xf32>
    %4 = arith.mulf %2, %3 : vector<8x1xf32>
    %5 = vector.broadcast %4 : vector<8x1xf32> to vector<8x256xf32>
    %6 = arith.subf %0, %5 : vector<8x256xf32>
    %7 = arith.mulf %6, %6 : vector<8x256xf32>
    %cst_2 = arith.constant dense<0.000000e+00> : vector<8xf32>
    %8 = vector.multi_reduction <add>, %7, %cst_2 [1] : vector<8x256xf32> to vector<8xf32>
    %9 = vector.shape_cast %8 : vector<8xf32> to vector<8x1xf32>
    %cst_3 = arith.constant 3.906250e-03 : f32
    %10 = vector.broadcast %cst_3 : f32 to vector<8x1xf32>
    %11 = arith.mulf %9, %10 : vector<8x1xf32>
    %c0_4 = arith.constant 0 : index
    %c0_5 = arith.constant 0 : index
    %12 = vector.load %arg2[%c0_4, %c0_5] : memref<8x1xf32, #tpu.memory_space<vmem>>, vector<8x1xf32>
    %cst_6 = arith.constant 9.99999997E-7 : f32
    %13 = vector.broadcast %cst_6 : f32 to vector<8x1xf32>
    %14 = arith.addf %11, %13 : vector<8x1xf32>
    %15 = math.rsqrt %14 : vector<8x1xf32>
    %16 = arith.mulf %12, %15 : vector<8x1xf32>
    %17 = vector.broadcast %16 : vector<8x1xf32> to vector<8x256xf32>
    %18 = arith.mulf %6, %17 : vector<8x256xf32>
    %c0_7 = arith.constant 0 : index
    %c0_8 = arith.constant 0 : index
    %19 = vector.load %arg3[%c0_7, %c0_8] : memref<8x1xf32, #tpu.memory_space<vmem>>, vector<8x1xf32>
    %20 = vector.broadcast %19 : vector<8x1xf32> to vector<8x256xf32>
    %21 = arith.addf %18, %20 : vector<8x256xf32>
    %c0_9 = arith.constant 0 : index
    %c0_10 = arith.constant 0 : index
    %22 = vector.load %arg4[%c0_9, %c0_10] : memref<8x256xf32, #tpu.memory_space<vmem>>, vector<8x256xf32>
    tpu.vector_store %arg4[%c0_9, %c0_10], %21 {strides = array<i32>} : memref<8x256xf32, #tpu.memory_space<vmem>>, vector<8x256xf32>,
    return
  }
  func.func @transform_0(%arg0: i32) -> (i32, i32) {
    %c0_i32 = arith.constant 0 : i32
    %c0_i32_0 = arith.constant 0 : i32
    return %arg0, %c0_i32 : i32, i32
  }
  func.func @transform_1(%arg0: i32) -> (i32, i32) {
    %c0_i32 = arith.constant 0 : i32
    %c0_i32_0 = arith.constant 0 : i32
    return %arg0, %c0_i32 : i32, i32
  }
  func.func @transform_2(%arg0: i32) -> (i32, i32) {
    %c0_i32 = arith.constant 0 : i32
    %c0_i32_0 = arith.constant 0 : i32
    return %arg0, %c0_i32 : i32, i32
  }
  func.func @transform_3(%arg0: i32) -> (i32, i32) {
    %c0_i32 = arith.constant 0 : i32
    %c0_i32_0 = arith.constant 0 : i32
    return %arg0, %c0_i32 : i32, i32
  }
}

</mosaic_0001>

<llo_original>
// kernel: tpu_custom_call.1
$region0: #{tpu_custom_call.1}
  #allocation0 [shape = 'u32[]', space=smem, size = 0x4, offset = 0x4, fixed_abs, tag = 'smem constant byte address 0x4 - core index']
  #allocation1 [shape = 'u32[144,128]{1,0:T(1,128)}', space=vmem, size = 0x12000, scoped, tag = 'internal scratch']
  %s0 = inlined_call_operand.vmem [shape: f32[8,256], index: 0, kind: input, shape index: {}]
  %s1 = inlined_call_operand.vmem [shape: f32[8,1], index: 1, kind: input, shape index: {}]
  %s2 = inlined_call_operand.vmem [shape: f32[8,1], index: 2, kind: input, shape index: {}]
  %s3 = inlined_call_operand.hbm [shape: f32[8,256], index: 3, kind: output, shape index: {}]
  %s4 = sld [smem:[#allocation0]]
  $region22: #{tpu_custom_call.1} parent=0
    _
  %s6 = ssub.s32 1, %s4
  %s7 = scalar_select 0, %s6, %s4
  $region1: #{tpu_custom_call.1} parent=0
    #allocation2 [shape = 'u8[8192]{0}', space=vmem, size = 0x2000, scoped, tag = 'output window, operand 0, single buffered']
    #allocation3 [shape = 's32[1]{0}', space=sflag, size = 0x4, scoped, tag = 'scoped memory for tpu_custom_call.1']
    %8 = vsyncpa [#allocation3], 0
    // Predicated region
    $region2: #{tpu_custom_call.1} parent=1 // pred_check
      _
    $region3: #{tpu_custom_call.1} parent=1 // pred_check_branch
      %10 = sbr.rel (0) target = $region5
    $region4: #{tpu_custom_call.1} parent=1 // pred_region
      _
    $region5: #{tpu_custom_call.1} parent=1 // pred_fallthru
      _
    // Predicated region
    $region6: #{tpu_custom_call.1} parent=1 // pred_check
      _
    $region7: #{tpu_custom_call.1} parent=1 // pred_check_branch
      %12 = sbr.rel (0) target = $region9
    $region8: #{tpu_custom_call.1} parent=1 // pred_region
      _
    $region9: #{tpu_custom_call.1} parent=1 // pred_fallthru
      _
    // Predicated region
    $region10: #{tpu_custom_call.1} parent=1 // pred_check
      _
    $region11: #{tpu_custom_call.1} parent=1 // pred_check_branch
      %14 = sbr.rel (0) target = $region13
    $region12: #{tpu_custom_call.1} parent=1 // pred_region
      _
    $region13: #{tpu_custom_call.1} parent=1 // pred_fallthru
      _
    %v15 = vld [vmem:[%s0] sm:$0xff]
    %v16 = vld [vmem:[%s0 + $0x8] sm:$0xff]
    %v17 = vadd.f32 %v15, %v16
    %18 = vadd.xlane.f32.xlu0 %v17
    %v19 = vpop.xlane.xlu0 %18
    %v20 = vmul.f32 %v19, 0.00390625
    %v21 = vsub.f32 %v15, %v20
    %v22 = vsub.f32 %v16, %v20
    %v23 = vmul.f32 %v21, %v21
    %v24 = vmul.f32 %v22, %v22
    %v25 = vadd.f32 %v23, %v24
    %26 = vadd.xlane.f32.xlu0 %v25
    %v27 = vpop.xlane.xlu0 %26
    %v28 = vmul.f32 %v27, 0.00390625
    %v29 = vld [vmem:[%s1] sm:$0xff]
    %v30 = vadd.f32 %v28, 1e-06
    %v31 = vrsqrt.pop %v30
    %v32 = vmul.f32 %v29, %v31
    %34 = vset.pattern.permute.xlu0 0
    %35 = vperm.xlu0 %34, %v32
    %v36 = vpop.permute.xlu0 %35
    %v38 = vmul.f32 %v21, %v36
    %v39 = vmul.f32 %v22, %v36
    %v40 = vld [vmem:[%s2] sm:$0xff]
    %42 = vset.pattern.permute.xlu0 0
    %43 = vperm.xlu0 %42, %v40
    %v44 = vpop.permute.xlu0 %43
    %v46 = vadd.f32 %v38, %v44
    %v47 = vadd.f32 %v39, %v44
    %48 = vst [vmem:[#allocation2] sm:$0xff] %v46
    %49 = vst [vmem:[#allocation2 + $0x8] sm:$0xff] %v47
    // Predicated region
    $region14: #{tpu_custom_call.1} parent=1 // pred_check
      _
    $region15: #{tpu_custom_call.1} parent=1 // pred_check_branch
      %51 = sbr.rel (0) target = $region17
    $region16: #{tpu_custom_call.1} parent=1 // pred_region
      %s53 = ssub.s32 256, 256
      %54 = vsyncadd [#allocation3], %s53
      %s56 = sshll.u32 [#allocation2], 4
      %s57 = int_to_ptr.vmem [resolvable:$true] %s56
      %59 = dma.vmem_to_hbm [thread:$0]  %s57, 256, %s3, [#allocation3]
    $region17: #{tpu_custom_call.1} parent=1 // pred_fallthru
      _
    // Predicated region
    $region18: #{tpu_custom_call.1} parent=1 // pred_check
      _
    $region19: #{tpu_custom_call.1} parent=1 // pred_check_branch
      %61 = sbr.rel (0) target = $region21
    $region20: #{tpu_custom_call.1} parent=1 // pred_region
      %62 = dma.done [#allocation3], 256
    $region21: #{tpu_custom_call.1} parent=1 // pred_fallthru
      _
    %63 = vsyncpa [#allocation3], 1

</llo_original>
